<compile_context>
chip_gen: v7x
topology: tpu7x:2x2x1
jax: 0.10.0
libtpu: 0.0.40
codegen_flags: <defaults>
</compile_context>

<pallas_src>
import jax
import jax.numpy as jnp
from jax.experimental import pallas as pl
from jax.experimental.pallas import tpu as pltpu


def _mm_kernel(x1_ref, x2_ref, out_ref, acc_ref):
    # Grid = (Mp//tm, Np//tn, Kp//tk); K is the last ("arbitrary") reduction axis.
    k = pl.program_id(2)

    @pl.when(k == 0)
    def _init():
        acc_ref[...] = jnp.zeros_like(acc_ref)

    # MXU matmul tile, accumulated in f32.
    acc_ref[...] += jnp.dot(
        x1_ref[...], x2_ref[...], preferred_element_type=jnp.float32
    )

    @pl.when(k == pl.num_programs(2) - 1)
    def _finalize():
        # Single unmasked, lane-dense (tm, tn) store.
        out_ref[...] = acc_ref[...].astype(out_ref.dtype)


def _round_up(x, m):
    return ((x + m - 1) // m) * m


def _pick_tile(padded_dim, max_tile, granule):
    """Largest multiple-of-`granule` divisor of `padded_dim` that is <= max_tile."""
    best = granule
    t = granule
    limit = min(padded_dim, max_tile)
    while t <= limit:
        if padded_dim % t == 0:
            best = t
        t += granule
    return best


def _pallas_matmul(x1, x2, *, tm=256, tn=256, tk=512, use_bf16=False):
    """Tiled f32-accumulated matmul on the MXU; handles non-aligned dims by padding."""
    M, K = x1.shape
    K2, N = x2.shape
    assert K == K2, "inner dimensions must match"
    out_dtype = x1.dtype

    # Pad dims up to layout granules ((8, 128) rule) and pick divisor tiles.
    Mp = _round_up(M, 8)
    Kp = _round_up(K, 128)
    Np = _round_up(N, 128)
    tm = _pick_tile(Mp, tm, 8)
    tk = _pick_tile(Kp, tk, 128)
    tn = _pick_tile(Np, tn, 128)

    # v7x megacore: make sure there are >= 2 independent (i, j) tiles to shard.
    if (Mp // tm) * (Np // tn) < 2 and tn >= 256:
        tn //= 2

    grid = (Mp // tm, Np // tn, Kp // tk)

    in_dtype = jnp.bfloat16 if use_bf16 else x1.dtype
    a = x1.astype(in_dtype)
    b = x2.astype(in_dtype)
    if (Mp, Kp) != (M, K):
        a = jnp.pad(a, ((0, Mp - M), (0, Kp - K)))
    if (Kp, Np) != (K, N):
        b = jnp.pad(b, ((0, Kp - K), (0, Np - N)))

    in_bytes = jnp.dtype(in_dtype).itemsize
    out_bytes = jnp.dtype(out_dtype).itemsize
    cost = pl.CostEstimate(
        flops=2 * Mp * Np * Kp,
        transcendentals=0,
        bytes_accessed=(
            in_bytes * (Mp * Kp * grid[1] + Kp * Np * grid[0]) + out_bytes * Mp * Np
        ),
    )

    out = pl.pallas_call(
        _mm_kernel,
        out_shape=jax.ShapeDtypeStruct((Mp, Np), out_dtype),
        grid=grid,
        in_specs=[
            pl.BlockSpec((tm, tk), lambda i, j, k: (i, k)),
            pl.BlockSpec((tk, tn), lambda i, j, k: (k, j)),
        ],
        out_specs=pl.BlockSpec((tm, tn), lambda i, j, k: (i, j)),
        scratch_shapes=[pltpu.VMEM((tm, tn), jnp.float32)],
        compiler_params=pltpu.CompilerParams(
            dimension_semantics=("parallel", "parallel", "arbitrary"),
        ),
        cost_estimate=cost,
    )(a, b)

    if (Mp, Np) != (M, N):
        out = out[:M, :N]
    return out


def mm_cat(x1, x2, *, tm=256, tn=256, tk=512, use_bf16=False, small_dim_threshold=128):
    """Equivalent of Model.forward: cat([x1 @ x2, x1 @ x2], dim=1)."""
    M, K = x1.shape
    K2, N = x2.shape
    assert K == K2, "inner dimensions must match"

    if min(M, N, K) < small_dim_threshold:
        # Tiny shapes (e.g. the module's 4x4 case) are pure launch/pipeline
        # overhead in Pallas; plain XLA wins outright here.
        v = jnp.dot(x1, x2)
    else:
        v = _pallas_matmul(x1, x2, tm=tm, tn=tn, tk=tk, use_bf16=use_bf16)

    # torch.cat([v, v], dim=1)
    return jnp.concatenate([v, v], axis=1)


def reference(x1, x2):
    v = x1 @ x2
    return jnp.concatenate([v, v], axis=1)


if __name__ == "__main__":
    key = jax.random.PRNGKey(0)
    k1, k2, k3, k4, k5, k6 = jax.random.split(key, 6)

    # Module-spec shapes: x1, x2 are (4, 4) float32 (small-shape fast path).
    x1 = jax.random.normal(k1, (4, 4), dtype=jnp.float32)
    x2 = jax.random.normal(k2, (4, 4), dtype=jnp.float32)
    out_small = mm_cat(x1, x2)
    jax.block_until_ready(out_small)
    assert out_small.shape == (4, 8), out_small.shape
    assert jnp.allclose(out_small, reference(x1, x2), atol=1e-5, rtol=1e-5), \
        "small-shape mismatch vs reference"

    # Exercise the tiled Pallas path at a small MXU-aligned size.
    a = jax.random.normal(k3, (256, 384), dtype=jnp.float32)
    b = jax.random.normal(k4, (384, 256), dtype=jnp.float32)
    out_big = mm_cat(a, b)
    jax.block_until_ready(out_big)
    assert out_big.shape == (256, 512), out_big.shape
    assert jnp.allclose(out_big, reference(a, b), atol=1e-3, rtol=1e-3), \
        "tiled-path mismatch vs reference"

    # Exercise the padded (non-tile-aligned) Pallas path.
    c = jax.random.normal(k5, (200, 384), dtype=jnp.float32)
    d = jax.random.normal(k6, (384, 200), dtype=jnp.float32)
    out_pad = mm_cat(c, d)
    jax.block_until_ready(out_pad)
    assert out_pad.shape == (200, 400), out_pad.shape
    assert jnp.allclose(out_pad, reference(c, d), atol=1e-3, rtol=1e-3), \
        "padded-path mismatch vs reference"

    print("KERNEL_OK")
</pallas_src>

<mosaic_0001>
module attributes {stable_mosaic.version = 11 : i64} {
  func.func @_mm_kernel(%arg0: i32, %arg1: i32, %arg2: i32, %arg3: memref<256x384xf32, #tpu.memory_space<vmem>>, %arg4: memref<384x128xf32, #tpu.memory_space<vmem>>, %arg5: memref<256x128xf32, #tpu.memory_space<vmem>>, %arg6: memref<256x128xf32, #tpu.memory_space<vmem>>) attributes {dimension_semantics = [#tpu.dimension_semantics<parallel>, #tpu.dimension_semantics<parallel>, #tpu.dimension_semantics<arbitrary>], iteration_bounds = array<i64: 1, 2, 1>, scalar_prefetch = 0 : i64, scratch_operands = 1 : i64, tpu.core_type = #tpu.core_type<tc>, window_params = [{transform_indices = @transform_0, window_bounds = array<i64: 256, 384>}, {transform_indices = @transform_1, window_bounds = array<i64: 384, 128>}, {transform_indices = @transform_2, window_bounds = array<i64: 256, 128>}]} {
    %c0_i32 = arith.constant 0 : i32
    %0 = arith.cmpi eq, %arg2, %c0_i32 : i32
    %1 = arith.extui %0 : i1 to i32
    %c0_i32_0 = arith.constant 0 : i32
    %2 = arith.cmpi ne, %1, %c0_i32_0 : i32
    scf.if %2 {
      %cst_10 = arith.constant 0.000000e+00 : f32
      %12 = vector.broadcast %cst_10 : f32 to vector<256x128xf32>
      %c0_11 = arith.constant 0 : index
      %c0_12 = arith.constant 0 : index
      %13 = vector.load %arg6[%c0_11, %c0_12] : memref<256x128xf32, #tpu.memory_space<vmem>>, vector<256x128xf32>
      tpu.vector_store %arg6[%c0_11, %c0_12], %12 {strides = array<i32>} : memref<256x128xf32, #tpu.memory_space<vmem>>, vector<256x128xf32>,
    } else {
    }
    %c0 = arith.constant 0 : index
    %c0_1 = arith.constant 0 : index
    %3 = vector.load %arg6[%c0, %c0_1] : memref<256x128xf32, #tpu.memory_space<vmem>>, vector<256x128xf32>
    %c0_2 = arith.constant 0 : index
    %c0_3 = arith.constant 0 : index
    %4 = vector.load %arg3[%c0_2, %c0_3] : memref<256x384xf32, #tpu.memory_space<vmem>>, vector<256x384xf32>
    %c0_4 = arith.constant 0 : index
    %c0_5 = arith.constant 0 : index
    %5 = vector.load %arg4[%c0_4, %c0_5] : memref<384x128xf32, #tpu.memory_space<vmem>>, vector<384x128xf32>
    %cst = arith.constant dense<0.000000e+00> : vector<256x128xf32>
    %6 = tpu.matmul %4, %5, %cst {dimension_numbers = #tpu.dot_dimension_numbers<[1], [0], [0], [1], [0, 0, 1, 1], [], []>} : vector<256x384xf32>, vector<384x128xf32>, vector<256x128xf32> -> vector<256x128xf32>
    %7 = arith.addf %3, %6 : vector<256x128xf32>
    %c0_6 = arith.constant 0 : index
    %c0_7 = arith.constant 0 : index
    %8 = vector.load %arg6[%c0_6, %c0_7] : memref<256x128xf32, #tpu.memory_space<vmem>>, vector<256x128xf32>
    tpu.vector_store %arg6[%c0_6, %c0_7], %7 {strides = array<i32>} : memref<256x128xf32, #tpu.memory_space<vmem>>, vector<256x128xf32>,
    %c0_i32_8 = arith.constant 0 : i32
    %9 = arith.cmpi eq, %arg2, %c0_i32_8 : i32
    %10 = arith.extui %9 : i1 to i32
    %c0_i32_9 = arith.constant 0 : i32
    %11 = arith.cmpi ne, %10, %c0_i32_9 : i32
    scf.if %11 {
      %c0_10 = arith.constant 0 : index
      %c0_11 = arith.constant 0 : index
      %12 = vector.load %arg6[%c0_10, %c0_11] : memref<256x128xf32, #tpu.memory_space<vmem>>, vector<256x128xf32>
      %c0_12 = arith.constant 0 : index
      %c0_13 = arith.constant 0 : index
      %13 = vector.load %arg5[%c0_12, %c0_13] : memref<256x128xf32, #tpu.memory_space<vmem>>, vector<256x128xf32>
      tpu.vector_store %arg5[%c0_12, %c0_13], %12 {strides = array<i32>} : memref<256x128xf32, #tpu.memory_space<vmem>>, vector<256x128xf32>,
    } else {
    }
    return
  }
  func.func @transform_0(%arg0: i32, %arg1: i32, %arg2: i32) -> (i32, i32) {
    %c0_i32 = arith.constant 0 : i32
    return %arg0, %arg2 : i32, i32
  }
  func.func @transform_1(%arg0: i32, %arg1: i32, %arg2: i32) -> (i32, i32) {
    %c0_i32 = arith.constant 0 : i32
    return %arg2, %arg1 : i32, i32
  }
  func.func @transform_2(%arg0: i32, %arg1: i32, %arg2: i32) -> (i32, i32) {
    %c0_i32 = arith.constant 0 : i32
    return %arg0, %arg1 : i32, i32
  }
}

</mosaic_0001>

<llo_original>
// kernel: tpu_custom_call.1
$region0: #{tpu_custom_call.1}
  #allocation0 [shape = 'u32[]', space=smem, size = 0x4, offset = 0x4, fixed_abs, tag = 'smem constant byte address 0x4 - core index']
  #allocation1 [shape = 'u32[144,128]{1,0:T(1,128)}', space=vmem, size = 0x12000, scoped, tag = 'internal scratch']
  #allocation2 [shape = 'f32[256,128]{1,0:T(8,128)}', space=vmem, size = 0x20000, scoped, tag = 'scratch operand']
  %s0 = inlined_call_operand.hbm [shape: f32[256,384], index: 0, kind: input, shape index: {}]
  %s1 = inlined_call_operand.hbm [shape: f32[384,256], index: 1, kind: input, shape index: {}]
  %s2 = inlined_call_operand.hbm [shape: f32[256,256], index: 2, kind: output, shape index: {}]
  %s3 = sld [smem:[#allocation0]]
  $region57: #{tpu_custom_call.1} parent=0
    _
  %s5 = ssub.s32 1, %s3
  %s6 = scalar_select 0, %s5, %s3
  $region1: #{tpu_custom_call.1} parent=0
    #allocation3 [shape = 'u8[393216]{0}', space=vmem, size = 0x60000, scoped, tag = 'input window, operand 0, single buffered']
    #allocation4 [shape = 's32[2]{0}', space=sflag, size = 0x8, scoped, tag = 'scoped memory for tpu_custom_call.1']
    #allocation5 [shape = 's32[2]{0}', space=sflag, size = 0x8, scoped, tag = 'scoped memory for tpu_custom_call.1']
    #allocation6 [shape = 'u8[393216]{0}', space=vmem, size = 0x60000, scoped, tag = 'input window, operand 1']
    #allocation7 [shape = 's32[2]{0}', space=sflag, size = 0x8, scoped, tag = 'scoped memory for tpu_custom_call.1']
    #allocation8 [shape = 'u8[262144]{0}', space=vmem, size = 0x40000, scoped, tag = 'output window, operand 0']
    %7 = vsyncpa [#allocation4], 0
    %8 = vsyncpa [#allocation7], 0
    %s9 = scalar_lea.sflag [#allocation7], 1
    %10 = vsyncpa %s9, 0
    %11 = vsyncpa [#allocation5], 0
    %s12 = scalar_lea.sflag [#allocation5], 1
    %13 = vsyncpa %s12, 0
    loop: start=0, step=1, limit=4
    $region2: #{tpu_custom_call.1} parent=1 // loop_pre_header
      _
    $region3: #{tpu_custom_call.1} parent=1 // loop_header
      %s15 = sphi 0, %s19
      %p16 = scmp.ge.s32.totalorder %s15, 4
      %s22 = sphi 0, %s41
      %s23 = sphi 0, %s37
      %s24 = sphi 0, %s33
      %s25 = sphi 0, %s22
      %s26 = sphi 0, %s23
      %s27 = sphi 0, %s24
      %s28 = sphi 0, %s25
      %s29 = sphi 0, %s26
      %s30 = sphi 0, %s27
      %s46 = sphi 0, %s48
      %s49 = sphi 0, %s46
      %s50 = sphi 0, %s49
      %s66 = sphi 0, %s50
      %s74 = sphi 0, %s76
      %s77 = sphi 0, %s74
      %s78 = sphi 0, %s77
      %s94 = sphi 0, %s78
      %s102 = sphi 0, %s104
      %s105 = sphi 0, %s102
      %s106 = sphi 0, %s105
      %s122 = sphi 0, %s106
    $region4: #{tpu_custom_call.1} parent=1 // loop_header_branch
      %18 = sbr.rel (%p16) target = $region8
    $region5: #{tpu_custom_call.1} parent=1 // loop_body
      %s20 = ssub.s32 %s15, 1
      %s21 = ssub.s32 %s15, 2
      %s31 = sadd.s32 1, %s24
      %p32 = scmp.ge.s32.totalorder %s31, 1
      %s33 = scalar_select %p32, 0, %s31
      %s34 = sadd.s32 1, %s23
      %s35 = scalar_select %p32, %s34, %s23
      %p36 = scmp.ge.s32.totalorder %s35, 2
      %s37 = scalar_select %p36, 0, %s35
      %s38 = sadd.s32 1, %s22
      %s39 = scalar_select %p36, %s38, %s22
      %p40 = scmp.ge.s32.totalorder %s39, 1
      %s41 = scalar_select %p40, 0, %s39
      %s42 = ssub.s32 %s22, %s41
      %s43 = ssub.s32 %s24, %s33
      %s44 = sor.u32 %s42, %s43
      %p45 = scmp.eq.s32.totalorder %s44, 0
      %s47 = sadd.s32 %s46, 1
      %s48 = scalar_select %p45, %s46, %s47
      %p51 = pneg %p45
      %p52 = scmp.eq.s32.totalorder %s15, 1
      %p53 = por %p51, %p52
      %p54 = scmp.ne.s32.totalorder %s46, %s49
      %p55 = scmp.eq.s32.totalorder %s15, 0
      %p56 = por %p54, %p55
      %p57 = scmp.ne.s32.totalorder %s46, %s49
      %p58 = scmp.eq.s32.totalorder %s20, 1
      %p59 = por %p57, %p58
      %p60 = scmp.ne.s32.totalorder %s49, %s50
      %p61 = scmp.eq.s32.totalorder %s20, 0
      %p62 = por %p60, %p61
      %p63 = scmp.ne.s32.totalorder %s49, %s50
      %p64 = scmp.eq.s32.totalorder %s21, 1
      %p65 = por %p63, %p64
      %p67 = scmp.ne.s32.totalorder %s50, %s66
      %p68 = scmp.eq.s32.totalorder %s21, 0
      %p69 = por %p67, %p68
      %s70 = ssub.s32 %s24, %s33
      %s71 = ssub.s32 %s23, %s37
      %s72 = sor.u32 %s70, %s71
      %p73 = scmp.eq.s32.totalorder %s72, 0
      %s75 = sadd.s32 %s74, 1
      %s76 = scalar_select %p73, %s74, %s75
      %p79 = pneg %p73
      %p80 = scmp.eq.s32.totalorder %s15, 1
      %p81 = por %p79, %p80
      %p82 = scmp.ne.s32.totalorder %s74, %s77
      %p83 = scmp.eq.s32.totalorder %s15, 0
      %p84 = por %p82, %p83
      %p85 = scmp.ne.s32.totalorder %s74, %s77
      %p86 = scmp.eq.s32.totalorder %s20, 1
      %p87 = por %p85, %p86
      %p88 = scmp.ne.s32.totalorder %s77, %s78
      %p89 = scmp.eq.s32.totalorder %s20, 0
      %p90 = por %p88, %p89
      %p91 = scmp.ne.s32.totalorder %s77, %s78
      %p92 = scmp.eq.s32.totalorder %s21, 1
      %p93 = por %p91, %p92
      %p95 = scmp.ne.s32.totalorder %s78, %s94
      %p96 = scmp.eq.s32.totalorder %s21, 0
      %p97 = por %p95, %p96
      %s98 = ssub.s32 %s22, %s41
      %s99 = ssub.s32 %s23, %s37
      %s100 = sor.u32 %s98, %s99
      %p101 = scmp.eq.s32.totalorder %s100, 0
      %s103 = sadd.s32 %s102, 1
      %s104 = scalar_select %p101, %s102, %s103
      %p107 = pneg %p101
      %p108 = scmp.eq.s32.totalorder %s15, 1
      %p109 = por %p107, %p108
      %p110 = scmp.ne.s32.totalorder %s102, %s105
      %p111 = scmp.eq.s32.totalorder %s15, 0
      %p112 = por %p110, %p111
      %p113 = scmp.ne.s32.totalorder %s102, %s105
      %p114 = scmp.eq.s32.totalorder %s20, 1
      %p115 = por %p113, %p114
      %p116 = scmp.ne.s32.totalorder %s105, %s106
      %p117 = scmp.eq.s32.totalorder %s20, 0
      %p118 = por %p116, %p117
      %p119 = scmp.ne.s32.totalorder %s105, %s106
      %p120 = scmp.eq.s32.totalorder %s21, 1
      %p121 = por %p119, %p120
      %p123 = scmp.ne.s32.totalorder %s106, %s122
      %p124 = scmp.eq.s32.totalorder %s21, 0
      %p125 = por %p123, %p124
      %p126 = scmp.le.s32.totalorder 1, %s15
      %p127 = scmp.lt.s32.totalorder %s15, 3
      %p128 = pnand %p126, %p127
      %p129 = pneg %p128
      // Predicated region
      $region9: #{tpu_custom_call.1} parent=5 // pred_check
        _
      $region10: #{tpu_custom_call.1} parent=5 // pred_check_branch
        %131 = sbr.rel (%p128) target = $region12
      $region11: #{tpu_custom_call.1} parent=5 // pred_region
        %s132 = ssub.s32 %s15, 1
        // Predicated region
        $region13: #{tpu_custom_call.1} parent=11 // pred_check
          %p133 = pneg %p62
        $region14: #{tpu_custom_call.1} parent=11 // pred_check_branch
          %135 = sbr.rel (%p133) target = $region16
        $region15: #{tpu_custom_call.1} parent=11 // pred_region
          %s136 = smul.u32 32, %s25
          %s137 = smul.u32 3, %s27
          %s139 = ssub.s32 12288, 12288
          %140 = vsyncadd [#allocation4], %s139
          %s141 = smul.addr %s136, 3
          %s142 = sadd.s32 %s137, %s141
          %s143 = smul.addr %s142, 128
          %s144 = scalar_lea.hbm %s0, %s143
          %s145 = sshll.u32 [#allocation3], 4
          %s146 = int_to_ptr.vmem [resolvable:$true] %s145
          %151 = dma.hbm_to_vmem [thread:$0]  %s144, 12288, %s146, [#allocation4], 384, 384, 24
        $region16: #{tpu_custom_call.1} parent=11 // pred_fallthru
          _
      $region12: #{tpu_custom_call.1} parent=5 // pred_fallthru
        _
      %p152 = scmp.lt.s32.totalorder %s15, 2
      // Predicated region
      $region17: #{tpu_custom_call.1} parent=5 // pred_check
        %p153 = pneg %p152
      $region18: #{tpu_custom_call.1} parent=5 // pred_check_branch
        %155 = sbr.rel (%p153) target = $region20
      $region19: #{tpu_custom_call.1} parent=5 // pred_region
        // Predicated region
        $region21: #{tpu_custom_call.1} parent=19 // pred_check
          %p156 = pneg %p84
        $region22: #{tpu_custom_call.1} parent=19 // pred_check_branch
          %158 = sbr.rel (%p156) target = $region24
        $region23: #{tpu_custom_call.1} parent=19 // pred_region
          %s159 = sand.u32 %s74, 1
          %s160 = scalar_lea.sflag [#allocation7], %s159
          %s161 = sand.u32 %s74, 1
          %s162 = smul.addr %s161, 384
          %s163 = scalar_lea.vmem [#allocation6], %s162
          %s164 = smul.u32 48, %s24
          %s166 = ssub.s32 6144, 6144
          %167 = vsyncadd %s160, %s166
          %s168 = smul.addr %s164, 2
          %s169 = sadd.s32 %s23, %s168
          %s170 = smul.addr %s169, 128
          %s171 = scalar_lea.hbm %s1, %s170
          %s172 = sshll.u32 %s163, 4
          %s173 = int_to_ptr.vmem [resolvable:$true] %s172
          %178 = dma.hbm_to_vmem [thread:$0]  %s171, 6144, %s173, %s160, 256, 128, 8
        $region24: #{tpu_custom_call.1} parent=19 // pred_fallthru
          _
      $region20: #{tpu_custom_call.1} parent=5 // pred_fallthru
        _
      %p179 = scmp.le.s32.totalorder 1, %s15
      %p180 = scmp.lt.s32.totalorder %s15, 3
      %p181 = pnand %p179, %p180
      %p182 = pneg %p181
      // Predicated region
      $region25: #{tpu_custom_call.1} parent=5 // pred_check
        _
      $region26: #{tpu_custom_call.1} parent=5 // pred_check_branch
        %184 = sbr.rel (%p181) target = $region28
      $region27: #{tpu_custom_call.1} parent=5 // pred_region
        %s185 = ssub.s32 %s15, 1
        // Predicated region
        $region29: #{tpu_custom_call.1} parent=27 // pred_check
          %p186 = pneg %p62
        $region30: #{tpu_custom_call.1} parent=27 // pred_check_branch
          %188 = sbr.rel (%p186) target = $region32
        $region31: #{tpu_custom_call.1} parent=27 // pred_region
          %189 = dma.done [#allocation4], 12288
        $region32: #{tpu_custom_call.1} parent=27 // pred_fallthru
          _
        %s190 = sand.u32 %s77, 1
        %s191 = scalar_lea.sflag [#allocation7], %s190
        %s192 = sand.u32 %s77, 1
        %s193 = smul.addr %s192, 384
        %s194 = scalar_lea.vmem [#allocation6], %s193
        // Predicated region
        $region33: #{tpu_custom_call.1} parent=27 // pred_check
          %p195 = pneg %p90
        $region34: #{tpu_custom_call.1} parent=27 // pred_check_branch
          %197 = sbr.rel (%p195) target = $region36
        $region35: #{tpu_custom_call.1} parent=27 // pred_region
          %198 = dma.done %s191, 6144
        $region36: #{tpu_custom_call.1} parent=27 // pred_fallthru
          _
        %p199 = pneg %p62
        %p200 = pneg %p59
        %s201 = sand.u32 %s77, 1
        %s202 = scalar_lea.sflag [#allocation7], %s201
        %s203 = sand.u32 %s77, 1
        %s204 = smul.addr %s203, 384
        %s205 = scalar_lea.vmem [#allocation6], %s204
        %p206 = pneg %p90
        %p207 = pneg %p87
        %p208 = pneg %p118
        %p209 = pneg %p115
        %s210 = sand.u32 %s105, 1
        %s211 = scalar_lea.sflag [#allocation5], %s210
        %s212 = sand.u32 %s105, 1
        %s213 = smul.addr %s212, 256
        %s214 = scalar_lea.vmem [#allocation8], %s213
        %s215 = smul.u32 32, %s25
        %s216 = smul.u32 3, %s27
        %s217 = smul.u32 48, %s27
        %s218 = smul.u32 32, %s25
        %p219 = scmp.eq.s32.totalorder %s27, 0
        // Predicated region
        $region37: #{tpu_custom_call.1} parent=27 // pred_check
          %p220 = pneg %p219
        $region38: #{tpu_custom_call.1} parent=27 // pred_check_branch
          %222 = sbr.rel (%p220) target = $region40
        $region39: #{tpu_custom_call.1} parent=27 // pred_region
          %223 = vst [vmem:[#allocation2] sm:$0xff] 0.0
          %224 = vst [vmem:[#allocation2 + $0x8] sm:$0xff] 0.0
          %225 = vst [vmem:[#allocation2 + $0x10] sm:$0xff] 0.0
          %226 = vst [vmem:[#allocation2 + $0x18] sm:$0xff] 0.0
          %227 = vst [vmem:[#allocation2 + $0x20] sm:$0xff] 0.0
          %228 = vst [vmem:[#allocation2 + $0x28] sm:$0xff] 0.0
          %229 = vst [vmem:[#allocation2 + $0x30] sm:$0xff] 0.0
          %230 = vst [vmem:[#allocation2 + $0x38] sm:$0xff] 0.0
          %231 = vst [vmem:[#allocation2 + $0x40] sm:$0xff] 0.0
          %232 = vst [vmem:[#allocation2 + $0x48] sm:$0xff] 0.0
          %233 = vst [vmem:[#allocation2 + $0x50] sm:$0xff] 0.0
          %234 = vst [vmem:[#allocation2 + $0x58] sm:$0xff] 0.0
          %235 = vst [vmem:[#allocation2 + $0x60] sm:$0xff] 0.0
          %236 = vst [vmem:[#allocation2 + $0x68] sm:$0xff] 0.0
          %237 = vst [vmem:[#allocation2 + $0x70] sm:$0xff] 0.0
          %238 = vst [vmem:[#allocation2 + $0x78] sm:$0xff] 0.0
          %239 = vst [vmem:[#allocation2 + $0x80] sm:$0xff] 0.0
          %240 = vst [vmem:[#allocation2 + $0x88] sm:$0xff] 0.0
          %241 = vst [vmem:[#allocation2 + $0x90] sm:$0xff] 0.0
          %242 = vst [vmem:[#allocation2 + $0x98] sm:$0xff] 0.0
          %243 = vst [vmem:[#allocation2 + $0xa0] sm:$0xff] 0.0
          %244 = vst [vmem:[#allocation2 + $0xa8] sm:$0xff] 0.0
          %245 = vst [vmem:[#allocation2 + $0xb0] sm:$0xff] 0.0
          %246 = vst [vmem:[#allocation2 + $0xb8] sm:$0xff] 0.0
          %247 = vst [vmem:[#allocation2 + $0xc0] sm:$0xff] 0.0
          %248 = vst [vmem:[#allocation2 + $0xc8] sm:$0xff] 0.0
          %249 = vst [vmem:[#allocation2 + $0xd0] sm:$0xff] 0.0
          %250 = vst [vmem:[#allocation2 + $0xd8] sm:$0xff] 0.0
          %251 = vst [vmem:[#allocation2 + $0xe0] sm:$0xff] 0.0
          %252 = vst [vmem:[#allocation2 + $0xe8] sm:$0xff] 0.0
          %253 = vst [vmem:[#allocation2 + $0xf0] sm:$0xff] 0.0
          %254 = vst [vmem:[#allocation2 + $0xf8] sm:$0xff] 0.0
        $region40: #{tpu_custom_call.1} parent=27 // pred_fallthru
          _
        %v255 = vld [vmem:[#allocation2] sm:$0xff]
        %v256 = vld [vmem:[#allocation2 + $0x8] sm:$0xff]
        %v257 = vld [vmem:[#allocation2 + $0x10] sm:$0xff]
        %v258 = vld [vmem:[#allocation2 + $0x18] sm:$0xff]
        %v259 = vld [vmem:[#allocation2 + $0x20] sm:$0xff]
        %v260 = vld [vmem:[#allocation2 + $0x28] sm:$0xff]
        %v261 = vld [vmem:[#allocation2 + $0x30] sm:$0xff]
        %v262 = vld [vmem:[#allocation2 + $0x38] sm:$0xff]
        %v263 = vld [vmem:[#allocation2 + $0x40] sm:$0xff]
        %v264 = vld [vmem:[#allocation2 + $0x48] sm:$0xff]
        %v265 = vld [vmem:[#allocation2 + $0x50] sm:$0xff]
        %v266 = vld [vmem:[#allocation2 + $0x58] sm:$0xff]
        %v267 = vld [vmem:[#allocation2 + $0x60] sm:$0xff]
        %v268 = vld [vmem:[#allocation2 + $0x68] sm:$0xff]
        %v269 = vld [vmem:[#allocation2 + $0x70] sm:$0xff]
        %v270 = vld [vmem:[#allocation2 + $0x78] sm:$0xff]
        %v271 = vld [vmem:[#allocation2 + $0x80] sm:$0xff]
        %v272 = vld [vmem:[#allocation2 + $0x88] sm:$0xff]
        %v273 = vld [vmem:[#allocation2 + $0x90] sm:$0xff]
        %v274 = vld [vmem:[#allocation2 + $0x98] sm:$0xff]
        %v275 = vld [vmem:[#allocation2 + $0xa0] sm:$0xff]
        %v276 = vld [vmem:[#allocation2 + $0xa8] sm:$0xff]
        %v277 = vld [vmem:[#allocation2 + $0xb0] sm:$0xff]
        %v278 = vld [vmem:[#allocation2 + $0xb8] sm:$0xff]
        %v279 = vld [vmem:[#allocation2 + $0xc0] sm:$0xff]
        %v280 = vld [vmem:[#allocation2 + $0xc8] sm:$0xff]
        %v281 = vld [vmem:[#allocation2 + $0xd0] sm:$0xff]
        %v282 = vld [vmem:[#allocation2 + $0xd8] sm:$0xff]
        %v283 = vld [vmem:[#allocation2 + $0xe0] sm:$0xff]
        %v284 = vld [vmem:[#allocation2 + $0xe8] sm:$0xff]
        %v285 = vld [vmem:[#allocation2 + $0xf0] sm:$0xff]
        %v286 = vld [vmem:[#allocation2 + $0xf8] sm:$0xff]
        %v287 = vld [vmem:[#allocation3] sm:$0xff]
        %v288 = vld [vmem:[#allocation3 + $0x8] sm:$0xff]
        %v289 = vld [vmem:[#allocation3 + $0x10] sm:$0xff]
        %v290 = vld [vmem:[#allocation3 + $0x18] sm:$0xff]
        %v291 = vld [vmem:[#allocation3 + $0x20] sm:$0xff]
        %v292 = vld [vmem:[#allocation3 + $0x28] sm:$0xff]
        %v293 = vld [vmem:[#allocation3 + $0x30] sm:$0xff]
        %v294 = vld [vmem:[#allocation3 + $0x38] sm:$0xff]
        %v295 = vld [vmem:[#allocation3 + $0x40] sm:$0xff]
        %v296 = vld [vmem:[#allocation3 + $0x48] sm:$0xff]
        %v297 = vld [vmem:[#allocation3 + $0x50] sm:$0xff]
        %v298 = vld [vmem:[#allocation3 + $0x58] sm:$0xff]
        %v299 = vld [vmem:[#allocation3 + $0x60] sm:$0xff]
        %v300 = vld [vmem:[#allocation3 + $0x68] sm:$0xff]
        %v301 = vld [vmem:[#allocation3 + $0x70] sm:$0xff]
        %v302 = vld [vmem:[#allocation3 + $0x78] sm:$0xff]
        %v303 = vld [vmem:[#allocation3 + $0x80] sm:$0xff]
        %v304 = vld [vmem:[#allocation3 + $0x88] sm:$0xff]
        %v305 = vld [vmem:[#allocation3 + $0x90] sm:$0xff]
        %v306 = vld [vmem:[#allocation3 + $0x98] sm:$0xff]
        %v307 = vld [vmem:[#allocation3 + $0xa0] sm:$0xff]
        %v308 = vld [vmem:[#allocation3 + $0xa8] sm:$0xff]
        %v309 = vld [vmem:[#allocation3 + $0xb0] sm:$0xff]
        %v310 = vld [vmem:[#allocation3 + $0xb8] sm:$0xff]
        %v311 = vld [vmem:[#allocation3 + $0xc0] sm:$0xff]
        %v312 = vld [vmem:[#allocation3 + $0xc8] sm:$0xff]
        %v313 = vld [vmem:[#allocation3 + $0xd0] sm:$0xff]
        %v314 = vld [vmem:[#allocation3 + $0xd8] sm:$0xff]
        %v315 = vld [vmem:[#allocation3 + $0xe0] sm:$0xff]
        %v316 = vld [vmem:[#allocation3 + $0xe8] sm:$0xff]
        %v317 = vld [vmem:[#allocation3 + $0xf0] sm:$0xff]
        %v318 = vld [vmem:[#allocation3 + $0xf8] sm:$0xff]
        %v319 = vld [vmem:[#allocation3 + $0x100] sm:$0xff]
        %v320 = vld [vmem:[#allocation3 + $0x108] sm:$0xff]
        %v321 = vld [vmem:[#allocation3 + $0x110] sm:$0xff]
        %v322 = vld [vmem:[#allocation3 + $0x118] sm:$0xff]
        %v323 = vld [vmem:[#allocation3 + $0x120] sm:$0xff]
        %v324 = vld [vmem:[#allocation3 + $0x128] sm:$0xff]
        %v325 = vld [vmem:[#allocation3 + $0x130] sm:$0xff]
        %v326 = vld [vmem:[#allocation3 + $0x138] sm:$0xff]
        %v327 = vld [vmem:[#allocation3 + $0x140] sm:$0xff]
        %v328 = vld [vmem:[#allocation3 + $0x148] sm:$0xff]
        %v329 = vld [vmem:[#allocation3 + $0x150] sm:$0xff]
        %v330 = vld [vmem:[#allocation3 + $0x158] sm:$0xff]
        %v331 = vld [vmem:[#allocation3 + $0x160] sm:$0xff]
        %v332 = vld [vmem:[#allocation3 + $0x168] sm:$0xff]
        %v333 = vld [vmem:[#allocation3 + $0x170] sm:$0xff]
        %v334 = vld [vmem:[#allocation3 + $0x178] sm:$0xff]
        %v335 = vld [vmem:[#allocation3 + $0x180] sm:$0xff]
        %v336 = vld [vmem:[#allocation3 + $0x188] sm:$0xff]
        %v337 = vld [vmem:[#allocation3 + $0x190] sm:$0xff]
        %v338 = vld [vmem:[#allocation3 + $0x198] sm:$0xff]
        %v339 = vld [vmem:[#allocation3 + $0x1a0] sm:$0xff]
        %v340 = vld [vmem:[#allocation3 + $0x1a8] sm:$0xff]
        %v341 = vld [vmem:[#allocation3 + $0x1b0] sm:$0xff]
        %v342 = vld [vmem:[#allocation3 + $0x1b8] sm:$0xff]
        %v343 = vld [vmem:[#allocation3 + $0x1c0] sm:$0xff]
        %v344 = vld [vmem:[#allocation3 + $0x1c8] sm:$0xff]
        %v345 = vld [vmem:[#allocation3 + $0x1d0] sm:$0xff]
        %v346 = vld [vmem:[#allocation3 + $0x1d8] sm:$0xff]
        %v347 = vld [vmem:[#allocation3 + $0x1e0] sm:$0xff]
        %v348 = vld [vmem:[#allocation3 + $0x1e8] sm:$0xff]
        %v349 = vld [vmem:[#allocation3 + $0x1f0] sm:$0xff]
        %v350 = vld [vmem:[#allocation3 + $0x1f8] sm:$0xff]
        %v351 = vld [vmem:[#allocation3 + $0x200] sm:$0xff]
        %v352 = vld [vmem:[#allocation3 + $0x208] sm:$0xff]
        %v353 = vld [vmem:[#allocation3 + $0x210] sm:$0xff]
        %v354 = vld [vmem:[#allocation3 + $0x218] sm:$0xff]
        %v355 = vld [vmem:[#allocation3 + $0x220] sm:$0xff]
        %v356 = vld [vmem:[#allocation3 + $0x228] sm:$0xff]
        %v357 = vld [vmem:[#allocation3 + $0x230] sm:$0xff]
        %v358 = vld [vmem:[#allocation3 + $0x238] sm:$0xff]
        %v359 = vld [vmem:[#allocation3 + $0x240] sm:$0xff]
        %v360 = vld [vmem:[#allocation3 + $0x248] sm:$0xff]
        %v361 = vld [vmem:[#allocation3 + $0x250] sm:$0xff]
        %v362 = vld [vmem:[#allocation3 + $0x258] sm:$0xff]
        %v363 = vld [vmem:[#allocation3 + $0x260] sm:$0xff]
        %v364 = vld [vmem:[#allocation3 + $0x268] sm:$0xff]
        %v365 = vld [vmem:[#allocation3 + $0x270] sm:$0xff]
        %v366 = vld [vmem:[#allocation3 + $0x278] sm:$0xff]
        %v367 = vld [vmem:[#allocation3 + $0x280] sm:$0xff]
        %v368 = vld [vmem:[#allocation3 + $0x288] sm:$0xff]
        %v369 = vld [vmem:[#allocation3 + $0x290] sm:$0xff]
        %v370 = vld [vmem:[#allocation3 + $0x298] sm:$0xff]
        %v371 = vld [vmem:[#allocation3 + $0x2a0] sm:$0xff]
        %v372 = vld [vmem:[#allocation3 + $0x2a8] sm:$0xff]
        %v373 = vld [vmem:[#allocation3 + $0x2b0] sm:$0xff]
        %v374 = vld [vmem:[#allocation3 + $0x2b8] sm:$0xff]
        %v375 = vld [vmem:[#allocation3 + $0x2c0] sm:$0xff]
        %v376 = vld [vmem:[#allocation3 + $0x2c8] sm:$0xff]
        %v377 = vld [vmem:[#allocation3 + $0x2d0] sm:$0xff]
        %v378 = vld [vmem:[#allocation3 + $0x2d8] sm:$0xff]
        %v379 = vld [vmem:[#allocation3 + $0x2e0] sm:$0xff]
        %v380 = vld [vmem:[#allocation3 + $0x2e8] sm:$0xff]
        %v381 = vld [vmem:[#allocation3 + $0x2f0] sm:$0xff]
        %v382 = vld [vmem:[#allocation3 + $0x2f8] sm:$0xff]
        %v383 = vld [vmem:[%s194] sm:$0xff]
        %v384 = vld [vmem:[%s194 + $0x8] sm:$0xff]
        %v385 = vld [vmem:[%s194 + $0x10] sm:$0xff]
        %v386 = vld [vmem:[%s194 + $0x18] sm:$0xff]
        %v387 = vld [vmem:[%s194 + $0x20] sm:$0xff]
        %v388 = vld [vmem:[%s194 + $0x28] sm:$0xff]
        %v389 = vld [vmem:[%s194 + $0x30] sm:$0xff]
        %v390 = vld [vmem:[%s194 + $0x38] sm:$0xff]
        %v391 = vld [vmem:[%s194 + $0x40] sm:$0xff]
        %v392 = vld [vmem:[%s194 + $0x48] sm:$0xff]
        %v393 = vld [vmem:[%s194 + $0x50] sm:$0xff]
        %v394 = vld [vmem:[%s194 + $0x58] sm:$0xff]
        %v395 = vld [vmem:[%s194 + $0x60] sm:$0xff]
        %v396 = vld [vmem:[%s194 + $0x68] sm:$0xff]
        %v397 = vld [vmem:[%s194 + $0x70] sm:$0xff]
        %v398 = vld [vmem:[%s194 + $0x78] sm:$0xff]
        %v399 = vld [vmem:[%s194 + $0x80] sm:$0xff]
        %v400 = vld [vmem:[%s194 + $0x88] sm:$0xff]
        %v401 = vld [vmem:[%s194 + $0x90] sm:$0xff]
        %v402 = vld [vmem:[%s194 + $0x98] sm:$0xff]
        %v403 = vld [vmem:[%s194 + $0xa0] sm:$0xff]
        %v404 = vld [vmem:[%s194 + $0xa8] sm:$0xff]
        %v405 = vld [vmem:[%s194 + $0xb0] sm:$0xff]
        %v406 = vld [vmem:[%s194 + $0xb8] sm:$0xff]
        %v407 = vld [vmem:[%s194 + $0xc0] sm:$0xff]
        %v408 = vld [vmem:[%s194 + $0xc8] sm:$0xff]
        %v409 = vld [vmem:[%s194 + $0xd0] sm:$0xff]
        %v410 = vld [vmem:[%s194 + $0xd8] sm:$0xff]
        %v411 = vld [vmem:[%s194 + $0xe0] sm:$0xff]
        %v412 = vld [vmem:[%s194 + $0xe8] sm:$0xff]
        %v413 = vld [vmem:[%s194 + $0xf0] sm:$0xff]
        %v414 = vld [vmem:[%s194 + $0xf8] sm:$0xff]
        %v415 = vld [vmem:[%s194 + $0x100] sm:$0xff]
        %v416 = vld [vmem:[%s194 + $0x108] sm:$0xff]
        %v417 = vld [vmem:[%s194 + $0x110] sm:$0xff]
        %v418 = vld [vmem:[%s194 + $0x118] sm:$0xff]
        %v419 = vld [vmem:[%s194 + $0x120] sm:$0xff]
        %v420 = vld [vmem:[%s194 + $0x128] sm:$0xff]
        %v421 = vld [vmem:[%s194 + $0x130] sm:$0xff]
        %v422 = vld [vmem:[%s194 + $0x138] sm:$0xff]
        %v423 = vld [vmem:[%s194 + $0x140] sm:$0xff]
        %v424 = vld [vmem:[%s194 + $0x148] sm:$0xff]
        %v425 = vld [vmem:[%s194 + $0x150] sm:$0xff]
        %v426 = vld [vmem:[%s194 + $0x158] sm:$0xff]
        %v427 = vld [vmem:[%s194 + $0x160] sm:$0xff]
        %v428 = vld [vmem:[%s194 + $0x168] sm:$0xff]
        %v429 = vld [vmem:[%s194 + $0x170] sm:$0xff]
        %v430 = vld [vmem:[%s194 + $0x178] sm:$0xff]
        %431 = vmatprep.subr.mxu0 0.0
        %432 = vmatpush1.msra.mxu0 %v383
        %433 = vmatprep.subr.mxu0 0.0
        %434 = vmatpush1.msra.mxu0 %v384
        %435 = vmatprep.subr.mxu0 0.0
        %436 = vmatpush1.msra.mxu0 %v385
        %437 = vmatprep.subr.mxu0 0.0
        %438 = vmatpush1.msra.mxu0 %v386
        %439 = vmatprep.subr.mxu0 0.0
        %440 = vmatpush1.msra.mxu0 %v387
        %441 = vmatprep.subr.mxu0 0.0
        %442 = vmatpush1.msra.mxu0 %v388
        %443 = vmatprep.subr.mxu0 0.0
        %444 = vmatpush1.msra.mxu0 %v389
        %445 = vmatprep.subr.mxu0 0.0
        %446 = vmatpush1.msra.mxu0 %v390
        %447 = vmatprep.subr.mxu0 0.0
        %448 = vmatpush1.msra.mxu0 %v391
        %449 = vmatprep.subr.mxu0 0.0
        %450 = vmatpush1.msra.mxu0 %v392
        %451 = vmatprep.subr.mxu0 0.0
        %452 = vmatpush1.msra.mxu0 %v393
        %453 = vmatprep.subr.mxu0 0.0
        %454 = vmatpush1.msra.mxu0 %v394
        %455 = vmatprep.subr.mxu0 0.0
        %456 = vmatpush1.msra.mxu0 %v395
        %457 = vmatprep.subr.mxu0 0.0
        %458 = vmatpush1.msra.mxu0 %v396
        %459 = vmatprep.subr.mxu0 0.0
        %460 = vmatpush1.msra.mxu0 %v397
        %461 = vmatprep.subr.mxu0 0.0
        %462 = vmatpush1.msra.mxu0 %v398
        %463 = vmatprep.subr.mxu0 0.0
        %464 = vmatpush1.msra.mxu0 %v399
        %465 = vmatprep.subr.mxu0 0.0
        %466 = vmatpush1.msra.mxu0 %v400
        %467 = vmatprep.subr.mxu0 0.0
        %468 = vmatpush1.msra.mxu0 %v401
        %469 = vmatprep.subr.mxu0 0.0
        %470 = vmatpush1.msra.mxu0 %v402
        %471 = vmatprep.subr.mxu0 0.0
        %472 = vmatpush1.msra.mxu0 %v403
        %473 = vmatprep.subr.mxu0 0.0
        %474 = vmatpush1.msra.mxu0 %v404
        %475 = vmatprep.subr.mxu0 0.0
        %476 = vmatpush1.msra.mxu0 %v405
        %477 = vmatprep.subr.mxu0 0.0
        %478 = vmatpush1.msra.mxu0 %v406
        %479 = vmatprep.subr.mxu0 0.0
        %480 = vmatpush1.msra.mxu0 %v407
        %481 = vmatprep.subr.mxu0 0.0
        %482 = vmatpush1.msra.mxu0 %v408
        %483 = vmatprep.subr.mxu0 0.0
        %484 = vmatpush1.msra.mxu0 %v409
        %485 = vmatprep.subr.mxu0 0.0
        %486 = vmatpush1.msra.mxu0 %v410
        %487 = vmatprep.subr.mxu0 0.0
        %488 = vmatpush1.msra.mxu0 %v411
        %489 = vmatprep.subr.mxu0 0.0
        %490 = vmatpush1.msra.mxu0 %v412
        %491 = vmatprep.subr.mxu0 0.0
        %492 = vmatpush1.msra.mxu0 %v413
        %493 = vmatprep.subr.mxu0 0.0
        %494 = vmatpush1.msra.mxu0 %v414
        %495 = vmatprep.mubr.f32.mxu0 %v288
        %496 = vmatmul.mubr.f32.gmra.mrb[0].mxu0 %v287
        %v497 = vpop.f32.mrb[0].mxu0
        %v498 = vadd.f32 0.0, %v497
        %v499 = vpop.f32.mrb[0].mxu0
        %500 = vmatprep.mubr.f32.mxu0 %v291
        %501 = vmatmul.mubr.f32.gmra.mrb[0].mxu0 %v290
        %v502 = vpop.f32.mrb[0].mxu0
        %v503 = vadd.f32 0.0, %v502
        %v504 = vpop.f32.mrb[0].mxu0
        %505 = vmatprep.mubr.f32.mxu0 %v294
        %506 = vmatmul.mubr.f32.gmra.mrb[0].mxu0 %v293
        %v507 = vpop.f32.mrb[0].mxu0
        %v508 = vadd.f32 0.0, %v507
        %v509 = vpop.f32.mrb[0].mxu0
        %510 = vmatprep.mubr.f32.mxu0 %v297
        %511 = vmatmul.mubr.f32.gmra.mrb[0].mxu0 %v296
        %v512 = vpop.f32.mrb[0].mxu0
        %v513 = vadd.f32 0.0, %v512
        %v514 = vpop.f32.mrb[0].mxu0
        %515 = vmatprep.mubr.f32.mxu0 %v300
        %516 = vmatmul.mubr.f32.gmra.mrb[0].mxu0 %v299
        %v517 = vpop.f32.mrb[0].mxu0
        %v518 = vadd.f32 0.0, %v517
        %v519 = vpop.f32.mrb[0].mxu0
        %520 = vmatprep.mubr.f32.mxu0 %v303
        %521 = vmatmul.mubr.f32.gmra.mrb[0].mxu0 %v302
        %v522 = vpop.f32.mrb[0].mxu0
        %v523 = vadd.f32 0.0, %v522
        %v524 = vpop.f32.mrb[0].mxu0
        %525 = vmatprep.mubr.f32.mxu0 %v306
        %526 = vmatmul.mubr.f32.gmra.mrb[0].mxu0 %v305
        %v527 = vpop.f32.mrb[0].mxu0
        %v528 = vadd.f32 0.0, %v527
        %v529 = vpop.f32.mrb[0].mxu0
        %530 = vmatprep.mubr.f32.mxu0 %v309
        %531 = vmatmul.mubr.f32.gmra.mrb[0].mxu0 %v308
        %v532 = vpop.f32.mrb[0].mxu0
        %v533 = vadd.f32 0.0, %v532
        %v534 = vpop.f32.mrb[0].mxu0
        %535 = vmatprep.mubr.f32.mxu0 %v312
        %536 = vmatmul.mubr.f32.gmra.mrb[0].mxu0 %v311
        %v537 = vpop.f32.mrb[0].mxu0
        %v538 = vadd.f32 0.0, %v537
        %v539 = vpop.f32.mrb[0].mxu0
        %540 = vmatprep.mubr.f32.mxu0 %v315
        %541 = vmatmul.mubr.f32.gmra.mrb[0].mxu0 %v314
        %v542 = vpop.f32.mrb[0].mxu0
        %v543 = vadd.f32 0.0, %v542
        %v544 = vpop.f32.mrb[0].mxu0
        %545 = vmatprep.mubr.f32.mxu0 %v318
        %546 = vmatmul.mubr.f32.gmra.mrb[0].mxu0 %v317
        %v547 = vpop.f32.mrb[0].mxu0
        %v548 = vadd.f32 0.0, %v547
        %v549 = vpop.f32.mrb[0].mxu0
        %550 = vmatprep.mubr.f32.mxu0 %v321
        %551 = vmatmul.mubr.f32.gmra.mrb[0].mxu0 %v320
        %v552 = vpop.f32.mrb[0].mxu0
        %v553 = vadd.f32 0.0, %v552
        %v554 = vpop.f32.mrb[0].mxu0
        %555 = vmatprep.mubr.f32.mxu0 %v324
        %556 = vmatmul.mubr.f32.gmra.mrb[0].mxu0 %v323
        %v557 = vpop.f32.mrb[0].mxu0
        %v558 = vadd.f32 0.0, %v557
        %v559 = vpop.f32.mrb[0].mxu0
        %560 = vmatprep.mubr.f32.mxu0 %v327
        %561 = vmatmul.mubr.f32.gmra.mrb[0].mxu0 %v326
        %v562 = vpop.f32.mrb[0].mxu0
        %v563 = vadd.f32 0.0, %v562
        %v564 = vpop.f32.mrb[0].mxu0
        %565 = vmatprep.mubr.f32.mxu0 %v330
        %566 = vmatmul.mubr.f32.gmra.mrb[0].mxu0 %v329
        %v567 = vpop.f32.mrb[0].mxu0
        %v568 = vadd.f32 0.0, %v567
        %v569 = vpop.f32.mrb[0].mxu0
        %570 = vmatprep.mubr.f32.mxu0 %v333
        %571 = vmatmul.mubr.f32.gmra.mrb[0].mxu0 %v332
        %v572 = vpop.f32.mrb[0].mxu0
        %v573 = vadd.f32 0.0, %v572
        %v574 = vpop.f32.mrb[0].mxu0
        %575 = vmatprep.mubr.f32.mxu0 %v336
        %576 = vmatmul.mubr.f32.gmra.mrb[0].mxu0 %v335
        %v577 = vpop.f32.mrb[0].mxu0
        %v578 = vadd.f32 0.0, %v577
        %v579 = vpop.f32.mrb[0].mxu0
        %580 = vmatprep.mubr.f32.mxu0 %v339
        %581 = vmatmul.mubr.f32.gmra.mrb[0].mxu0 %v338
        %v582 = vpop.f32.mrb[0].mxu0
        %v583 = vadd.f32 0.0, %v582
        %v584 = vpop.f32.mrb[0].mxu0
        %585 = vmatprep.mubr.f32.mxu0 %v342
        %586 = vmatmul.mubr.f32.gmra.mrb[0].mxu0 %v341
        %v587 = vpop.f32.mrb[0].mxu0
        %v588 = vadd.f32 0.0, %v587
        %v589 = vpop.f32.mrb[0].mxu0
        %590 = vmatprep.mubr.f32.mxu0 %v345
        %591 = vmatmul.mubr.f32.gmra.mrb[0].mxu0 %v344
        %v592 = vpop.f32.mrb[0].mxu0
        %v593 = vadd.f32 0.0, %v592
        %v594 = vpop.f32.mrb[0].mxu0
        %595 = vmatprep.mubr.f32.mxu0 %v348
        %596 = vmatmul.mubr.f32.gmra.mrb[0].mxu0 %v347
        %v597 = vpop.f32.mrb[0].mxu0
        %v598 = vadd.f32 0.0, %v597
        %v599 = vpop.f32.mrb[0].mxu0
        %600 = vmatprep.mubr.f32.mxu0 %v351
        %601 = vmatmul.mubr.f32.gmra.mrb[0].mxu0 %v350
        %v602 = vpop.f32.mrb[0].mxu0
        %v603 = vadd.f32 0.0, %v602
        %v604 = vpop.f32.mrb[0].mxu0
        %605 = vmatprep.mubr.f32.mxu0 %v354
        %606 = vmatmul.mubr.f32.gmra.mrb[0].mxu0 %v353
        %v607 = vpop.f32.mrb[0].mxu0
        %v608 = vadd.f32 0.0, %v607
        %v609 = vpop.f32.mrb[0].mxu0
        %610 = vmatprep.mubr.f32.mxu0 %v357
        %611 = vmatmul.mubr.f32.gmra.mrb[0].mxu0 %v356
        %v612 = vpop.f32.mrb[0].mxu0
        %v613 = vadd.f32 0.0, %v612
        %v614 = vpop.f32.mrb[0].mxu0
        %615 = vmatprep.mubr.f32.mxu0 %v360
        %616 = vmatmul.mubr.f32.gmra.mrb[0].mxu0 %v359
        %v617 = vpop.f32.mrb[0].mxu0
        %v618 = vadd.f32 0.0, %v617
        %v619 = vpop.f32.mrb[0].mxu0
        %620 = vmatprep.mubr.f32.mxu0 %v363
        %621 = vmatmul.mubr.f32.gmra.mrb[0].mxu0 %v362
        %v622 = vpop.f32.mrb[0].mxu0
        %v623 = vadd.f32 0.0, %v622
        %v624 = vpop.f32.mrb[0].mxu0
        %625 = vmatprep.mubr.f32.mxu0 %v366
        %626 = vmatmul.mubr.f32.gmra.mrb[0].mxu0 %v365
        %v627 = vpop.f32.mrb[0].mxu0
        %v628 = vadd.f32 0.0, %v627
        %v629 = vpop.f32.mrb[0].mxu0
        %630 = vmatprep.mubr.f32.mxu0 %v369
        %631 = vmatmul.mubr.f32.gmra.mrb[0].mxu0 %v368
        %v632 = vpop.f32.mrb[0].mxu0
        %v633 = vadd.f32 0.0, %v632
        %v634 = vpop.f32.mrb[0].mxu0
        %635 = vmatprep.mubr.f32.mxu0 %v372
        %636 = vmatmul.mubr.f32.gmra.mrb[0].mxu0 %v371
        %v637 = vpop.f32.mrb[0].mxu0
        %v638 = vadd.f32 0.0, %v637
        %v639 = vpop.f32.mrb[0].mxu0
        %640 = vmatprep.mubr.f32.mxu0 %v375
        %641 = vmatmul.mubr.f32.gmra.mrb[0].mxu0 %v374
        %v642 = vpop.f32.mrb[0].mxu0
        %v643 = vadd.f32 0.0, %v642
        %v644 = vpop.f32.mrb[0].mxu0
        %645 = vmatprep.mubr.f32.mxu0 %v378
        %646 = vmatmul.mubr.f32.gmra.mrb[0].mxu0 %v377
        %v647 = vpop.f32.mrb[0].mxu0
        %v648 = vadd.f32 0.0, %v647
        %v649 = vpop.f32.mrb[0].mxu0
        %650 = vmatprep.mubr.f32.mxu0 %v381
        %651 = vmatmul.mubr.f32.gmra.mrb[0].mxu0 %v380
        %v652 = vpop.f32.mrb[0].mxu0
        %v653 = vadd.f32 0.0, %v652
        %v654 = vpop.f32.mrb[0].mxu0
        %655 = vdwg.mxu0
        %656 = vmatprep.subr.mxu0 0.0
        %657 = vmatpush1.msra.mxu0 %v415
        %658 = vmatprep.subr.mxu0 0.0
        %659 = vmatpush1.msra.mxu0 %v416
        %660 = vmatprep.subr.mxu0 0.0
        %661 = vmatpush1.msra.mxu0 %v417
        %662 = vmatprep.subr.mxu0 0.0
        %663 = vmatpush1.msra.mxu0 %v418
        %664 = vmatprep.subr.mxu0 0.0
        %665 = vmatpush1.msra.mxu0 %v419
        %666 = vmatprep.subr.mxu0 0.0
        %667 = vmatpush1.msra.mxu0 %v420
        %668 = vmatprep.subr.mxu0 0.0
        %669 = vmatpush1.msra.mxu0 %v421
        %670 = vmatprep.subr.mxu0 0.0
        %671 = vmatpush1.msra.mxu0 %v422
        %672 = vmatprep.subr.mxu0 0.0
        %673 = vmatpush1.msra.mxu0 %v423
        %674 = vmatprep.subr.mxu0 0.0
        %675 = vmatpush1.msra.mxu0 %v424
        %676 = vmatprep.subr.mxu0 0.0
        %677 = vmatpush1.msra.mxu0 %v425
        %678 = vmatprep.subr.mxu0 0.0
        %679 = vmatpush1.msra.mxu0 %v426
        %680 = vmatprep.subr.mxu0 0.0
        %681 = vmatpush1.msra.mxu0 %v427
        %682 = vmatprep.subr.mxu0 0.0
        %683 = vmatpush1.msra.mxu0 %v428
        %684 = vmatprep.subr.mxu0 0.0
        %685 = vmatpush1.msra.mxu0 %v429
        %686 = vmatprep.subr.mxu0 0.0
        %687 = vmatpush1.msra.mxu0 %v430
        %688 = vmatprep.subr.mxu0 0.0
        %689 = vmatpush1.msra.mxu0 0.0
        %690 = vmatprep.subr.mxu0 0.0
        %691 = vmatpush1.msra.mxu0 0.0
        %692 = vmatprep.subr.mxu0 0.0
        %693 = vmatpush1.msra.mxu0 0.0
        %694 = vmatprep.subr.mxu0 0.0
        %695 = vmatpush1.msra.mxu0 0.0
        %696 = vmatprep.subr.mxu0 0.0
        %697 = vmatpush1.msra.mxu0 0.0
        %698 = vmatprep.subr.mxu0 0.0
        %699 = vmatpush1.msra.mxu0 0.0
        %700 = vmatprep.subr.mxu0 0.0
        %701 = vmatpush1.msra.mxu0 0.0
        %702 = vmatprep.subr.mxu0 0.0
        %703 = vmatpush1.msra.mxu0 0.0
        %704 = vmatprep.subr.mxu0 0.0
        %705 = vmatpush1.msra.mxu0 0.0
        %706 = vmatprep.subr.mxu0 0.0
        %707 = vmatpush1.msra.mxu0 0.0
        %708 = vmatprep.subr.mxu0 0.0
        %709 = vmatpush1.msra.mxu0 0.0
        %710 = vmatprep.subr.mxu0 0.0
        %711 = vmatpush1.msra.mxu0 0.0
        %712 = vmatprep.subr.mxu0 0.0
        %713 = vmatpush1.msra.mxu0 0.0
        %714 = vmatprep.subr.mxu0 0.0
        %715 = vmatpush1.msra.mxu0 0.0
        %716 = vmatprep.subr.mxu0 0.0
        %717 = vmatpush1.msra.mxu0 0.0
        %718 = vmatprep.subr.mxu0 0.0
        %719 = vmatpush1.msra.mxu0 0.0
        %720 = vmatprep.mubr.f32.mxu0 0.0
        %721 = vmatmul.mubr.f32.gmra.mrb[0].mxu0 %v289
        %v722 = vpop.f32.mrb[0].mxu0
        %v723 = vadd.f32 %v498, %v722
        %v724 = vpop.f32.mrb[0].mxu0
        %725 = vmatprep.mubr.f32.mxu0 0.0
        %726 = vmatmul.mubr.f32.gmra.mrb[0].mxu0 %v292
        %v727 = vpop.f32.mrb[0].mxu0
        %v728 = vadd.f32 %v503, %v727
        %v729 = vpop.f32.mrb[0].mxu0
        %730 = vmatprep.mubr.f32.mxu0 0.0
        %731 = vmatmul.mubr.f32.gmra.mrb[0].mxu0 %v295
        %v732 = vpop.f32.mrb[0].mxu0
        %v733 = vadd.f32 %v508, %v732
        %v734 = vpop.f32.mrb[0].mxu0
        %735 = vmatprep.mubr.f32.mxu0 0.0
        %736 = vmatmul.mubr.f32.gmra.mrb[0].mxu0 %v298
        %v737 = vpop.f32.mrb[0].mxu0
        %v738 = vadd.f32 %v513, %v737
        %v739 = vpop.f32.mrb[0].mxu0
        %740 = vmatprep.mubr.f32.mxu0 0.0
        %741 = vmatmul.mubr.f32.gmra.mrb[0].mxu0 %v301
        %v742 = vpop.f32.mrb[0].mxu0
        %v743 = vadd.f32 %v518, %v742
        %v744 = vpop.f32.mrb[0].mxu0
        %745 = vmatprep.mubr.f32.mxu0 0.0
        %746 = vmatmul.mubr.f32.gmra.mrb[0].mxu0 %v304
        %v747 = vpop.f32.mrb[0].mxu0
        %v748 = vadd.f32 %v523, %v747
        %v749 = vpop.f32.mrb[0].mxu0
        %750 = vmatprep.mubr.f32.mxu0 0.0
        %751 = vmatmul.mubr.f32.gmra.mrb[0].mxu0 %v307
        %v752 = vpop.f32.mrb[0].mxu0
        %v753 = vadd.f32 %v528, %v752
        %v754 = vpop.f32.mrb[0].mxu0
        %755 = vmatprep.mubr.f32.mxu0 0.0
        %756 = vmatmul.mubr.f32.gmra.mrb[0].mxu0 %v310
        %v757 = vpop.f32.mrb[0].mxu0
        %v758 = vadd.f32 %v533, %v757
        %v759 = vpop.f32.mrb[0].mxu0
        %760 = vmatprep.mubr.f32.mxu0 0.0
        %761 = vmatmul.mubr.f32.gmra.mrb[0].mxu0 %v313
        %v762 = vpop.f32.mrb[0].mxu0
        %v763 = vadd.f32 %v538, %v762
        %v764 = vpop.f32.mrb[0].mxu0
        %765 = vmatprep.mubr.f32.mxu0 0.0
        %766 = vmatmul.mubr.f32.gmra.mrb[0].mxu0 %v316
        %v767 = vpop.f32.mrb[0].mxu0
        %v768 = vadd.f32 %v543, %v767
        %v769 = vpop.f32.mrb[0].mxu0
        %770 = vmatprep.mubr.f32.mxu0 0.0
        %771 = vmatmul.mubr.f32.gmra.mrb[0].mxu0 %v319
        %v772 = vpop.f32.mrb[0].mxu0
        %v773 = vadd.f32 %v548, %v772
        %v774 = vpop.f32.mrb[0].mxu0
        %775 = vmatprep.mubr.f32.mxu0 0.0
        %776 = vmatmul.mubr.f32.gmra.mrb[0].mxu0 %v322
        %v777 = vpop.f32.mrb[0].mxu0
        %v778 = vadd.f32 %v553, %v777
        %v779 = vpop.f32.mrb[0].mxu0
        %780 = vmatprep.mubr.f32.mxu0 0.0
        %781 = vmatmul.mubr.f32.gmra.mrb[0].mxu0 %v325
        %v782 = vpop.f32.mrb[0].mxu0
        %v783 = vadd.f32 %v558, %v782
        %v784 = vpop.f32.mrb[0].mxu0
        %785 = vmatprep.mubr.f32.mxu0 0.0
        %786 = vmatmul.mubr.f32.gmra.mrb[0].mxu0 %v328
        %v787 = vpop.f32.mrb[0].mxu0
        %v788 = vadd.f32 %v563, %v787
        %v789 = vpop.f32.mrb[0].mxu0
        %790 = vmatprep.mubr.f32.mxu0 0.0
        %791 = vmatmul.mubr.f32.gmra.mrb[0].mxu0 %v331
        %v792 = vpop.f32.mrb[0].mxu0
        %v793 = vadd.f32 %v568, %v792
        %v794 = vpop.f32.mrb[0].mxu0
        %795 = vmatprep.mubr.f32.mxu0 0.0
        %796 = vmatmul.mubr.f32.gmra.mrb[0].mxu0 %v334
        %v797 = vpop.f32.mrb[0].mxu0
        %v798 = vadd.f32 %v573, %v797
        %v799 = vpop.f32.mrb[0].mxu0
        %800 = vmatprep.mubr.f32.mxu0 0.0
        %801 = vmatmul.mubr.f32.gmra.mrb[0].mxu0 %v337
        %v802 = vpop.f32.mrb[0].mxu0
        %v803 = vadd.f32 %v578, %v802
        %v804 = vpop.f32.mrb[0].mxu0
        %805 = vmatprep.mubr.f32.mxu0 0.0
        %806 = vmatmul.mubr.f32.gmra.mrb[0].mxu0 %v340
        %v807 = vpop.f32.mrb[0].mxu0
        %v808 = vadd.f32 %v583, %v807
        %v809 = vpop.f32.mrb[0].mxu0
        %810 = vmatprep.mubr.f32.mxu0 0.0
        %811 = vmatmul.mubr.f32.gmra.mrb[0].mxu0 %v343
        %v812 = vpop.f32.mrb[0].mxu0
        %v813 = vadd.f32 %v588, %v812
        %v814 = vpop.f32.mrb[0].mxu0
        %815 = vmatprep.mubr.f32.mxu0 0.0
        %816 = vmatmul.mubr.f32.gmra.mrb[0].mxu0 %v346
        %v817 = vpop.f32.mrb[0].mxu0
        %v818 = vadd.f32 %v593, %v817
        %v819 = vpop.f32.mrb[0].mxu0
        %820 = vmatprep.mubr.f32.mxu0 0.0
        %821 = vmatmul.mubr.f32.gmra.mrb[0].mxu0 %v349
        %v822 = vpop.f32.mrb[0].mxu0
        %v823 = vadd.f32 %v598, %v822
        %v824 = vpop.f32.mrb[0].mxu0
        %825 = vmatprep.mubr.f32.mxu0 0.0
        %826 = vmatmul.mubr.f32.gmra.mrb[0].mxu0 %v352
        %v827 = vpop.f32.mrb[0].mxu0
        %v828 = vadd.f32 %v603, %v827
        %v829 = vpop.f32.mrb[0].mxu0
        %830 = vmatprep.mubr.f32.mxu0 0.0
        %831 = vmatmul.mubr.f32.gmra.mrb[0].mxu0 %v355
        %v832 = vpop.f32.mrb[0].mxu0
        %v833 = vadd.f32 %v608, %v832
        %v834 = vpop.f32.mrb[0].mxu0
        %835 = vmatprep.mubr.f32.mxu0 0.0
        %836 = vmatmul.mubr.f32.gmra.mrb[0].mxu0 %v358
        %v837 = vpop.f32.mrb[0].mxu0
        %v838 = vadd.f32 %v613, %v837
        %v839 = vpop.f32.mrb[0].mxu0
        %840 = vmatprep.mubr.f32.mxu0 0.0
        %841 = vmatmul.mubr.f32.gmra.mrb[0].mxu0 %v361
        %v842 = vpop.f32.mrb[0].mxu0
        %v843 = vadd.f32 %v618, %v842
        %v844 = vpop.f32.mrb[0].mxu0
        %845 = vmatprep.mubr.f32.mxu0 0.0
        %846 = vmatmul.mubr.f32.gmra.mrb[0].mxu0 %v364
        %v847 = vpop.f32.mrb[0].mxu0
        %v848 = vadd.f32 %v623, %v847
        %v849 = vpop.f32.mrb[0].mxu0
        %850 = vmatprep.mubr.f32.mxu0 0.0
        %851 = vmatmul.mubr.f32.gmra.mrb[0].mxu0 %v367
        %v852 = vpop.f32.mrb[0].mxu0
        %v853 = vadd.f32 %v628, %v852
        %v854 = vpop.f32.mrb[0].mxu0
        %855 = vmatprep.mubr.f32.mxu0 0.0
        %856 = vmatmul.mubr.f32.gmra.mrb[0].mxu0 %v370
        %v857 = vpop.f32.mrb[0].mxu0
        %v858 = vadd.f32 %v633, %v857
        %v859 = vpop.f32.mrb[0].mxu0
        %860 = vmatprep.mubr.f32.mxu0 0.0
        %861 = vmatmul.mubr.f32.gmra.mrb[0].mxu0 %v373
        %v862 = vpop.f32.mrb[0].mxu0
        %v863 = vadd.f32 %v638, %v862
        %v864 = vpop.f32.mrb[0].mxu0
        %865 = vmatprep.mubr.f32.mxu0 0.0
        %866 = vmatmul.mubr.f32.gmra.mrb[0].mxu0 %v376
        %v867 = vpop.f32.mrb[0].mxu0
        %v868 = vadd.f32 %v643, %v867
        %v869 = vpop.f32.mrb[0].mxu0
        %870 = vmatprep.mubr.f32.mxu0 0.0
        %871 = vmatmul.mubr.f32.gmra.mrb[0].mxu0 %v379
        %v872 = vpop.f32.mrb[0].mxu0
        %v873 = vadd.f32 %v648, %v872
        %v874 = vpop.f32.mrb[0].mxu0
        %875 = vmatprep.mubr.f32.mxu0 0.0
        %876 = vmatmul.mubr.f32.gmra.mrb[0].mxu0 %v382
        %v877 = vpop.f32.mrb[0].mxu0
        %v878 = vadd.f32 %v653, %v877
        %v879 = vpop.f32.mrb[0].mxu0
        %880 = vdwg.mxu0
        %v881 = vadd.f32 %v255, %v723
        %v882 = vadd.f32 %v256, %v728
        %v883 = vadd.f32 %v257, %v733
        %v884 = vadd.f32 %v258, %v738
        %v885 = vadd.f32 %v259, %v743
        %v886 = vadd.f32 %v260, %v748
        %v887 = vadd.f32 %v261, %v753
        %v888 = vadd.f32 %v262, %v758
        %v889 = vadd.f32 %v263, %v763
        %v890 = vadd.f32 %v264, %v768
        %v891 = vadd.f32 %v265, %v773
        %v892 = vadd.f32 %v266, %v778
        %v893 = vadd.f32 %v267, %v783
        %v894 = vadd.f32 %v268, %v788
        %v895 = vadd.f32 %v269, %v793
        %v896 = vadd.f32 %v270, %v798
        %v897 = vadd.f32 %v271, %v803
        %v898 = vadd.f32 %v272, %v808
        %v899 = vadd.f32 %v273, %v813
        %v900 = vadd.f32 %v274, %v818
        %v901 = vadd.f32 %v275, %v823
        %v902 = vadd.f32 %v276, %v828
        %v903 = vadd.f32 %v277, %v833
        %v904 = vadd.f32 %v278, %v838
        %v905 = vadd.f32 %v279, %v843
        %v906 = vadd.f32 %v280, %v848
        %v907 = vadd.f32 %v281, %v853
        %v908 = vadd.f32 %v282, %v858
        %v909 = vadd.f32 %v283, %v863
        %v910 = vadd.f32 %v284, %v868
        %v911 = vadd.f32 %v285, %v873
        %v912 = vadd.f32 %v286, %v878
        %913 = vst [vmem:[#allocation2] sm:$0xff] %v881
        %914 = vst [vmem:[#allocation2 + $0x8] sm:$0xff] %v882
        %915 = vst [vmem:[#allocation2 + $0x10] sm:$0xff] %v883
        %916 = vst [vmem:[#allocation2 + $0x18] sm:$0xff] %v884
        %917 = vst [vmem:[#allocation2 + $0x20] sm:$0xff] %v885
        %918 = vst [vmem:[#allocation2 + $0x28] sm:$0xff] %v886
        %919 = vst [vmem:[#allocation2 + $0x30] sm:$0xff] %v887
        %920 = vst [vmem:[#allocation2 + $0x38] sm:$0xff] %v888
        %921 = vst [vmem:[#allocation2 + $0x40] sm:$0xff] %v889
        %922 = vst [vmem:[#allocation2 + $0x48] sm:$0xff] %v890
        %923 = vst [vmem:[#allocation2 + $0x50] sm:$0xff] %v891
        %924 = vst [vmem:[#allocation2 + $0x58] sm:$0xff] %v892
        %925 = vst [vmem:[#allocation2 + $0x60] sm:$0xff] %v893
        %926 = vst [vmem:[#allocation2 + $0x68] sm:$0xff] %v894
        %927 = vst [vmem:[#allocation2 + $0x70] sm:$0xff] %v895
        %928 = vst [vmem:[#allocation2 + $0x78] sm:$0xff] %v896
        %929 = vst [vmem:[#allocation2 + $0x80] sm:$0xff] %v897
        %930 = vst [vmem:[#allocation2 + $0x88] sm:$0xff] %v898
        %931 = vst [vmem:[#allocation2 + $0x90] sm:$0xff] %v899
        %932 = vst [vmem:[#allocation2 + $0x98] sm:$0xff] %v900
        %933 = vst [vmem:[#allocation2 + $0xa0] sm:$0xff] %v901
        %934 = vst [vmem:[#allocation2 + $0xa8] sm:$0xff] %v902
        %935 = vst [vmem:[#allocation2 + $0xb0] sm:$0xff] %v903
        %936 = vst [vmem:[#allocation2 + $0xb8] sm:$0xff] %v904
        %937 = vst [vmem:[#allocation2 + $0xc0] sm:$0xff] %v905
        %938 = vst [vmem:[#allocation2 + $0xc8] sm:$0xff] %v906
        %939 = vst [vmem:[#allocation2 + $0xd0] sm:$0xff] %v907
        %940 = vst [vmem:[#allocation2 + $0xd8] sm:$0xff] %v908
        %941 = vst [vmem:[#allocation2 + $0xe0] sm:$0xff] %v909
        %942 = vst [vmem:[#allocation2 + $0xe8] sm:$0xff] %v910
        %943 = vst [vmem:[#allocation2 + $0xf0] sm:$0xff] %v911
        %944 = vst [vmem:[#allocation2 + $0xf8] sm:$0xff] %v912
        // Predicated region
        $region41: #{tpu_custom_call.1} parent=27 // pred_check
          %p945 = pneg %p219
        $region42: #{tpu_custom_call.1} parent=27 // pred_check_branch
          %947 = sbr.rel (%p945) target = $region44
        $region43: #{tpu_custom_call.1} parent=27 // pred_region
          %v948 = vld [vmem:[#allocation2] sm:$0xff]
          %v949 = vld [vmem:[#allocation2 + $0x8] sm:$0xff]
          %v950 = vld [vmem:[#allocation2 + $0x10] sm:$0xff]
          %v951 = vld [vmem:[#allocation2 + $0x18] sm:$0xff]
          %v952 = vld [vmem:[#allocation2 + $0x20] sm:$0xff]
          %v953 = vld [vmem:[#allocation2 + $0x28] sm:$0xff]
          %v954 = vld [vmem:[#allocation2 + $0x30] sm:$0xff]
          %v955 = vld [vmem:[#allocation2 + $0x38] sm:$0xff]
          %v956 = vld [vmem:[#allocation2 + $0x40] sm:$0xff]
          %v957 = vld [vmem:[#allocation2 + $0x48] sm:$0xff]
          %v958 = vld [vmem:[#allocation2 + $0x50] sm:$0xff]
          %v959 = vld [vmem:[#allocation2 + $0x58] sm:$0xff]
          %v960 = vld [vmem:[#allocation2 + $0x60] sm:$0xff]
          %v961 = vld [vmem:[#allocation2 + $0x68] sm:$0xff]
          %v962 = vld [vmem:[#allocation2 + $0x70] sm:$0xff]
          %v963 = vld [vmem:[#allocation2 + $0x78] sm:$0xff]
          %v964 = vld [vmem:[#allocation2 + $0x80] sm:$0xff]
          %v965 = vld [vmem:[#allocation2 + $0x88] sm:$0xff]
          %v966 = vld [vmem:[#allocation2 + $0x90] sm:$0xff]
          %v967 = vld [vmem:[#allocation2 + $0x98] sm:$0xff]
          %v968 = vld [vmem:[#allocation2 + $0xa0] sm:$0xff]
          %v969 = vld [vmem:[#allocation2 + $0xa8] sm:$0xff]
          %v970 = vld [vmem:[#allocation2 + $0xb0] sm:$0xff]
          %v971 = vld [vmem:[#allocation2 + $0xb8] sm:$0xff]
          %v972 = vld [vmem:[#allocation2 + $0xc0] sm:$0xff]
          %v973 = vld [vmem:[#allocation2 + $0xc8] sm:$0xff]
          %v974 = vld [vmem:[#allocation2 + $0xd0] sm:$0xff]
          %v975 = vld [vmem:[#allocation2 + $0xd8] sm:$0xff]
          %v976 = vld [vmem:[#allocation2 + $0xe0] sm:$0xff]
          %v977 = vld [vmem:[#allocation2 + $0xe8] sm:$0xff]
          %v978 = vld [vmem:[#allocation2 + $0xf0] sm:$0xff]
          %v979 = vld [vmem:[#allocation2 + $0xf8] sm:$0xff]
          %980 = vst [vmem:[%s214] sm:$0xff] %v948
          %981 = vst [vmem:[%s214 + $0x8] sm:$0xff] %v949
          %982 = vst [vmem:[%s214 + $0x10] sm:$0xff] %v950
          %983 = vst [vmem:[%s214 + $0x18] sm:$0xff] %v951
          %984 = vst [vmem:[%s214 + $0x20] sm:$0xff] %v952
          %985 = vst [vmem:[%s214 + $0x28] sm:$0xff] %v953
          %986 = vst [vmem:[%s214 + $0x30] sm:$0xff] %v954
          %987 = vst [vmem:[%s214 + $0x38] sm:$0xff] %v955
          %988 = vst [vmem:[%s214 + $0x40] sm:$0xff] %v956
          %989 = vst [vmem:[%s214 + $0x48] sm:$0xff] %v957
          %990 = vst [vmem:[%s214 + $0x50] sm:$0xff] %v958
          %991 = vst [vmem:[%s214 + $0x58] sm:$0xff] %v959
          %992 = vst [vmem:[%s214 + $0x60] sm:$0xff] %v960
          %993 = vst [vmem:[%s214 + $0x68] sm:$0xff] %v961
          %994 = vst [vmem:[%s214 + $0x70] sm:$0xff] %v962
          %995 = vst [vmem:[%s214 + $0x78] sm:$0xff] %v963
          %996 = vst [vmem:[%s214 + $0x80] sm:$0xff] %v964
          %997 = vst [vmem:[%s214 + $0x88] sm:$0xff] %v965
          %998 = vst [vmem:[%s214 + $0x90] sm:$0xff] %v966
          %999 = vst [vmem:[%s214 + $0x98] sm:$0xff] %v967
          %1000 = vst [vmem:[%s214 + $0xa0] sm:$0xff] %v968
          %1001 = vst [vmem:[%s214 + $0xa8] sm:$0xff] %v969
          %1002 = vst [vmem:[%s214 + $0xb0] sm:$0xff] %v970
          %1003 = vst [vmem:[%s214 + $0xb8] sm:$0xff] %v971
          %1004 = vst [vmem:[%s214 + $0xc0] sm:$0xff] %v972
          %1005 = vst [vmem:[%s214 + $0xc8] sm:$0xff] %v973
          %1006 = vst [vmem:[%s214 + $0xd0] sm:$0xff] %v974
          %1007 = vst [vmem:[%s214 + $0xd8] sm:$0xff] %v975
          %1008 = vst [vmem:[%s214 + $0xe0] sm:$0xff] %v976
          %1009 = vst [vmem:[%s214 + $0xe8] sm:$0xff] %v977
          %1010 = vst [vmem:[%s214 + $0xf0] sm:$0xff] %v978
          %1011 = vst [vmem:[%s214 + $0xf8] sm:$0xff] %v979
        $region44: #{tpu_custom_call.1} parent=27 // pred_fallthru
          _
        %s1012 = sand.u32 %s105, 1
        %s1013 = scalar_lea.sflag [#allocation5], %s1012
        %s1014 = sand.u32 %s105, 1
        %s1015 = smul.addr %s1014, 256
        %s1016 = scalar_lea.vmem [#allocation8], %s1015
        // Predicated region
        $region45: #{tpu_custom_call.1} parent=27 // pred_check
          %p1017 = pneg %p115
        $region46: #{tpu_custom_call.1} parent=27 // pred_check_branch
          %1019 = sbr.rel (%p1017) target = $region48
        $region47: #{tpu_custom_call.1} parent=27 // pred_region
          %s1020 = smul.u32 32, %s25
          %s1022 = ssub.s32 4096, 4096
          %1023 = vsyncadd %s1013, %s1022
          %s1024 = smul.addr %s1020, 2
          %s1025 = sadd.s32 %s26, %s1024
          %s1026 = smul.addr %s1025, 128
          %s1027 = scalar_lea.hbm %s2, %s1026
          %s1028 = sshll.u32 %s1016, 4
          %s1029 = int_to_ptr.vmem [resolvable:$true] %s1028
          %1034 = dma.vmem_to_hbm [thread:$0]  %s1029, 4096, %s1027, %s1013, 128, 256, 8
        $region48: #{tpu_custom_call.1} parent=27 // pred_fallthru
          _
      $region28: #{tpu_custom_call.1} parent=5 // pred_fallthru
        _
      %p1035 = scmp.le.s32.totalorder 2, %s15
      // Predicated region
      $region49: #{tpu_custom_call.1} parent=5 // pred_check
        %p1036 = pneg %p1035
      $region50: #{tpu_custom_call.1} parent=5 // pred_check_branch
        %1038 = sbr.rel (%p1036) target = $region52
      $region51: #{tpu_custom_call.1} parent=5 // pred_region
        %s1039 = ssub.s32 %s15, 2
        // Predicated region
        $region53: #{tpu_custom_call.1} parent=51 // pred_check
          %p1040 = pneg %p121
        $region54: #{tpu_custom_call.1} parent=51 // pred_check_branch
          %1042 = sbr.rel (%p1040) target = $region56
        $region55: #{tpu_custom_call.1} parent=51 // pred_region
          %s1043 = sand.u32 %s106, 1
          %s1044 = scalar_lea.sflag [#allocation5], %s1043
          %s1045 = sand.u32 %s106, 1
          %s1046 = smul.addr %s1045, 256
          %s1047 = scalar_lea.vmem [#allocation8], %s1046
          %1048 = dma.done %s1044, 4096
        $region56: #{tpu_custom_call.1} parent=51 // pred_fallthru
          _
      $region52: #{tpu_custom_call.1} parent=5 // pred_fallthru
        _
    $region6: #{tpu_custom_call.1} parent=1 // loop_footer
      %s19 = sadd.s32 1, %s15
    $region7: #{tpu_custom_call.1} parent=1 // loop_footer_branch
      %14 = sbr.rel target = $region3
    $region8: #{tpu_custom_call.1} parent=1 // loop_exit
      _
    %1049 = vsyncpa [#allocation4], 1
    %s1050 = scalar_lea.sflag [#allocation4], 1
    %1051 = vsyncpa %s1050, 1
    %1052 = vsyncpa [#allocation7], 1
    %s1053 = scalar_lea.sflag [#allocation7], 1
    %1054 = vsyncpa %s1053, 1
    %1055 = vsyncpa [#allocation5], 1
    %s1056 = scalar_lea.sflag [#allocation5], 1
    %1057 = vsyncpa %s1056, 1

</llo_original>
